<compile_context>
chip_gen: v7x
topology: tpu7x:2x2x1
jax: 0.10.0
libtpu: 0.0.40
codegen_flags: <defaults>
</compile_context>

<pallas_src>
import functools

import jax
import jax.numpy as jnp
from jax.experimental import pallas as pl
from jax.experimental.pallas import tpu as pltpu


def _sample_and_group_kernel(xyzt_ref, feat_ref, o_samp_ref, o_feat_ref, *,
                             sample_num, radius, neighbor_num):
    S = sample_num
    K = neighbor_num
    xyz3n = xyzt_ref[0].astype(jnp.float32)          # (3, N), lane-dense in N
    N = xyz3n.shape[1]
    C = feat_ref.shape[2]

    x0 = xyz3n[0:1, :]                               # (1, N) coordinate rows
    x1 = xyz3n[1:2, :]
    x2 = xyz3n[2:3, :]
    lane_n = jax.lax.broadcasted_iota(jnp.int32, (1, N), 1)
    sub_s = jax.lax.broadcasted_iota(jnp.int32, (S, 1), 0)

    # ---------------- farthest point sampling ----------------
    # TODO(synk): PyTorch starts FPS from a random point; fixed to index 0 here.
    def fps_body(i, carry):
        dist, sel, sx, sy, sz = carry
        # current centroid coordinates (one lane-reduce over the (3,N) block)
        cen3 = jnp.sum(xyz3n * sel, axis=1, keepdims=True)          # (3, 1)
        cx, cy, cz = cen3[0:1, :], cen3[1:2, :], cen3[2:3, :]       # (1, 1) each
        # stash centroid into per-coordinate sample columns (pure VPU scatter)
        oh = (sub_s == i).astype(jnp.float32)                       # (S, 1)
        sx = sx + cx * oh
        sy = sy + cy * oh
        sz = sz + cz * oh
        # squared distance to centroid, running minimum (pure VPU)
        d0 = x0 - cx
        d1 = x1 - cy
        d2 = x2 - cz
        di = d0 * d0 + d1 * d1 + d2 * d2                            # (1, N)
        dist = jnp.minimum(dist, di)
        # next farthest = first index attaining the max distance
        m = jnp.max(dist)
        far = jnp.min(jnp.where(dist == m, lane_n, jnp.int32(N)))
        sel = (lane_n == far).astype(jnp.float32)
        return dist, sel, sx, sy, sz

    dist0 = jnp.full((1, N), 1e10, dtype=jnp.float32)
    sel0 = (lane_n == 0).astype(jnp.float32)
    zcol = jnp.zeros((S, 1), jnp.float32)
    _, _, sx, sy, sz = jax.lax.fori_loop(0, S, fps_body,
                                         (dist0, sel0, zcol, zcol, zcol))

    # sampled points -> (S, 3) output block (lane selects, one full-block store)
    lane3 = jax.lax.broadcasted_iota(jnp.int32, (S, 3), 1)
    samp = jnp.where(lane3 == 0, sx, jnp.where(lane3 == 1, sy, sz))
    o_samp_ref[0] = samp.astype(o_samp_ref.dtype)

    # ---------------- ball query ----------------
    # squared distances query-vs-all on the VPU: (S,1) against (1,N) broadcasts
    dx = sx - x0
    dy = sy - x1
    dz = sz - x2
    sqd = dx * dx + dy * dy + dz * dz                                # (S, N)
    within = sqd <= (radius * radius)
    w_f = within.astype(jnp.float32)

    # exclusive rank of each point among in-radius points (ascending index):
    # rank[s, n] = #{m < n : within[s, m]} via strictly-upper-tri matmul.
    # TODO(synk): for large N replace the (N,N) tri matmul by a lane prefix-sum.
    row = jax.lax.broadcasted_iota(jnp.int32, (N, N), 0)
    col = jax.lax.broadcasted_iota(jnp.int32, (N, N), 1)
    tri = (row < col).astype(jnp.float32)
    rank = jnp.dot(w_f, tri, preferred_element_type=jnp.float32)     # (S, N)
    count = jnp.sum(w_f, axis=1, keepdims=True)                      # (S, 1)

    # one-hot rows for every neighbor slot (vectorized; no per-k reductions).
    # Slot 0 always exists: the query point itself is at distance 0 <= radius^2.
    g0 = (within & (rank < 0.5)).astype(jnp.float32)                 # (S, N)
    gs = [g0]
    for k in range(1, K):
        gk = (within & (jnp.abs(rank - float(k)) < 0.5)).astype(jnp.float32)
        gs.append(jnp.where(count > float(k), gk, g0))               # pad w/ first
    gbig = jnp.concatenate(gs, axis=0)                               # (K*S, N), k-major

    # ---------------- fused neighbor-feature gather (single MXU matmul) --------
    feat_v = feat_ref[0]                                             # (N, C), native dtype
    grouped = jnp.dot(gbig.astype(feat_v.dtype), feat_v,
                      preferred_element_type=jnp.float32)            # (K*S, C)

    # scatter k-major result rows into the lane-dense (S, K*C) output block
    for k in range(K):
        o_feat_ref[0, :, k * C:(k + 1) * C] = (
            grouped[k * S:(k + 1) * S, :].astype(o_feat_ref.dtype))


def sample_and_group(xyz, feat, *, sample_num, radius, neighbor_num):
    B, N, _ = xyz.shape
    C = feat.shape[-1]
    S, K = sample_num, neighbor_num

    xyz_t = jnp.transpose(xyz, (0, 2, 1)).astype(jnp.float32)        # (B, 3, N)

    kernel = functools.partial(
        _sample_and_group_kernel,
        sample_num=S, radius=float(radius), neighbor_num=K)

    sample_xyz, grouped = pl.pallas_call(
        kernel,
        out_shape=(
            jax.ShapeDtypeStruct((B, S, 3), xyz.dtype),
            jax.ShapeDtypeStruct((B, S, K * C), feat.dtype),
        ),
        grid=(B,),
        in_specs=[
            pl.BlockSpec((1, 3, N), lambda b: (b, 0, 0)),
            pl.BlockSpec((1, N, C), lambda b: (b, 0, 0)),
        ],
        out_specs=(
            pl.BlockSpec((1, S, 3), lambda b: (b, 0, 0)),
            pl.BlockSpec((1, S, K * C), lambda b: (b, 0, 0)),
        ),
        # batch axis marked parallel so both TensorCores get work on v7x
        compiler_params=pltpu.CompilerParams(dimension_semantics=("parallel",)),
    )(xyz_t, feat)

    feat_group = grouped.reshape(B, S, K, C)                          # free reshape
    return sample_xyz, feat_group


# ---------------------------------------------------------------------------
if __name__ == "__main__":
    B, N, C = 2, 64, 16          # point cloud: (B, N, 3), features: (B, N, C)
    SAMPLE_NUM = 16
    RADIUS = 0.3
    NEIGHBOR_NUM = 8

    key = jax.random.PRNGKey(0)
    k_xyz, k_feat = jax.random.split(key)
    xyz = jax.random.uniform(k_xyz, (B, N, 3), dtype=jnp.float32)
    feat = jax.random.normal(k_feat, (B, N, C), dtype=jnp.float32)

    sample_xyz, feat_group = sample_and_group(
        xyz, feat, sample_num=SAMPLE_NUM, radius=RADIUS, neighbor_num=NEIGHBOR_NUM
    )
    sample_xyz = jax.block_until_ready(sample_xyz)
    feat_group = jax.block_until_ready(feat_group)

    assert sample_xyz.shape == (B, SAMPLE_NUM, 3)
    assert feat_group.shape == (B, SAMPLE_NUM, NEIGHBOR_NUM, C)
    assert bool(jnp.all(jnp.isfinite(sample_xyz)))
    assert bool(jnp.all(jnp.isfinite(feat_group)))

    print("KERNEL_OK")
</pallas_src>

<mosaic_0001>
module attributes {stable_mosaic.version = 11 : i64} {
  func.func @_sample_and_group_kernel(%arg0: i32, %arg1: memref<1x3x64xf32, #tpu.memory_space<vmem>>, %arg2: memref<1x64x16xf32, #tpu.memory_space<vmem>>, %arg3: memref<1x16x3xf32, #tpu.memory_space<vmem>>, %arg4: memref<1x16x128xf32, #tpu.memory_space<vmem>>) attributes {dimension_semantics = [#tpu.dimension_semantics<parallel>], iteration_bounds = array<i64: 2>, scalar_prefetch = 0 : i64, scratch_operands = 0 : i64, tpu.core_type = #tpu.core_type<tc>, window_params = [{transform_indices = @transform_0, window_bounds = array<i64: 1, 3, 64>}, {transform_indices = @transform_1, window_bounds = array<i64: 1, 64, 16>}, {transform_indices = @transform_2, window_bounds = array<i64: 1, 16, 3>}, {transform_indices = @transform_3, window_bounds = array<i64: 1, 16, 128>}]} {
    %c0 = arith.constant 0 : index
    %c0_0 = arith.constant 0 : index
    %c0_1 = arith.constant 0 : index
    %0 = vector.load %arg1[%c0, %c0_0, %c0_1] : memref<1x3x64xf32, #tpu.memory_space<vmem>>, vector<1x3x64xf32>
    %1 = vector.shape_cast %0 : vector<1x3x64xf32> to vector<3x64xf32>
    %2 = vector.extract_strided_slice %1 {offsets = [0, 0], sizes = [1, 64], strides = [1, 1]} : vector<3x64xf32> to vector<1x64xf32>
    %3 = vector.extract_strided_slice %1 {offsets = [1, 0], sizes = [1, 64], strides = [1, 1]} : vector<3x64xf32> to vector<1x64xf32>
    %4 = vector.extract_strided_slice %1 {offsets = [2, 0], sizes = [1, 64], strides = [1, 1]} : vector<3x64xf32> to vector<1x64xf32>
    %5 = tpu.iota {dimensions = array<i32: 1>} : vector<1x64xi32>
    %6 = tpu.iota {dimensions = array<i32: 0>} : vector<16x1xi32>
    %cst = arith.constant 1.000000e+10 : f32
    %7 = vector.broadcast %cst : f32 to vector<1x64xf32>
    %c0_i32 = arith.constant 0 : i32
    %8 = vector.broadcast %c0_i32 : i32 to vector<1x64xi32>
    %9 = arith.cmpi eq, %5, %8 : vector<1x64xi32>
    %10 = arith.extui %9 : vector<1x64xi1> to vector<1x64xi32>
    %11 = arith.sitofp %10 : vector<1x64xi32> to vector<1x64xf32>
    %cst_2 = arith.constant 0.000000e+00 : f32
    %12 = vector.broadcast %cst_2 : f32 to vector<16x1xf32>
    %c0_i32_3 = arith.constant 0 : i32
    %c16_i32 = arith.constant 16 : i32
    %13 = arith.addi %c0_i32_3, %c16_i32 : i32
    %c1_i32 = arith.constant 1 : i32
    %14:5 = scf.for %arg5 = %c0_i32_3 to %13 step %c1_i32 iter_args(%arg6 = %7, %arg7 = %11, %arg8 = %12, %arg9 = %12, %arg10 = %12) -> (vector<1x64xf32>, vector<1x64xf32>, vector<16x1xf32>, vector<16x1xf32>, vector<16x1xf32>)  : i32 {
      %189 = vector.broadcast %arg7 : vector<1x64xf32> to vector<3x64xf32>
      %190 = arith.mulf %1, %189 : vector<3x64xf32>
      %cst_56 = arith.constant dense<0.000000e+00> : vector<3xf32>
      %191 = vector.multi_reduction <add>, %190, %cst_56 [1] : vector<3x64xf32> to vector<3xf32>
      %192 = vector.shape_cast %191 : vector<3xf32> to vector<3x1xf32>
      %193 = vector.extract_strided_slice %192 {offsets = [0, 0], sizes = [1, 1], strides = [1, 1]} : vector<3x1xf32> to vector<1x1xf32>
      %194 = vector.extract_strided_slice %192 {offsets = [1, 0], sizes = [1, 1], strides = [1, 1]} : vector<3x1xf32> to vector<1x1xf32>
      %195 = vector.extract_strided_slice %192 {offsets = [2, 0], sizes = [1, 1], strides = [1, 1]} : vector<3x1xf32> to vector<1x1xf32>
      %196 = vector.broadcast %arg5 : i32 to vector<16x1xi32>
      %197 = arith.cmpi eq, %6, %196 : vector<16x1xi32>
      %198 = arith.extui %197 : vector<16x1xi1> to vector<16x1xi32>
      %199 = arith.sitofp %198 : vector<16x1xi32> to vector<16x1xf32>
      %200 = vector.broadcast %193 : vector<1x1xf32> to vector<16x1xf32>
      %201 = arith.mulf %200, %199 : vector<16x1xf32>
      %202 = arith.addf %arg8, %201 : vector<16x1xf32>
      %203 = vector.broadcast %194 : vector<1x1xf32> to vector<16x1xf32>
      %204 = arith.mulf %203, %199 : vector<16x1xf32>
      %205 = arith.addf %arg9, %204 : vector<16x1xf32>
      %206 = vector.broadcast %195 : vector<1x1xf32> to vector<16x1xf32>
      %207 = arith.mulf %206, %199 : vector<16x1xf32>
      %208 = arith.addf %arg10, %207 : vector<16x1xf32>
      %209 = vector.broadcast %193 : vector<1x1xf32> to vector<1x64xf32>
      %210 = arith.subf %2, %209 : vector<1x64xf32>
      %211 = vector.broadcast %194 : vector<1x1xf32> to vector<1x64xf32>
      %212 = arith.subf %3, %211 : vector<1x64xf32>
      %213 = vector.broadcast %195 : vector<1x1xf32> to vector<1x64xf32>
      %214 = arith.subf %4, %213 : vector<1x64xf32>
      %215 = arith.mulf %210, %210 : vector<1x64xf32>
      %216 = arith.mulf %212, %212 : vector<1x64xf32>
      %217 = arith.addf %215, %216 : vector<1x64xf32>
      %218 = arith.mulf %214, %214 : vector<1x64xf32>
      %219 = arith.addf %217, %218 : vector<1x64xf32>
      %220 = arith.minimumf %arg6, %219 : vector<1x64xf32>
      %221 = vector.shape_cast %220 : vector<1x64xf32> to vector<1x1x64xf32>
      %cst_57 = arith.constant dense<0xFF800000> : vector<1xf32>
      %222 = vector.multi_reduction <maximumf>, %221, %cst_57 [1, 2] : vector<1x1x64xf32> to vector<1xf32>
      %223 = vector.shape_cast %222 : vector<1xf32> to vector<1x1x1xf32>
      %224 = vector.extract %223[0, 0, 0] : f32 from vector<1x1x1xf32>
      %225 = vector.broadcast %224 : f32 to vector<1x64xf32>
      %226 = arith.cmpf oeq, %220, %225 : vector<1x64xf32>
      %c64_i32 = arith.constant 64 : i32
      %227 = vector.broadcast %c64_i32 : i32 to vector<1x64xi32>
      %228 = arith.select %226, %5, %227 : vector<1x64xi1>, vector<1x64xi32>
      %229 = vector.shape_cast %228 : vector<1x64xi32> to vector<1x1x64xi32>
      %cst_58 = arith.constant dense<2147483647> : vector<1xi32>
      %230 = vector.multi_reduction <minsi>, %229, %cst_58 [1, 2] : vector<1x1x64xi32> to vector<1xi32>
      %231 = vector.shape_cast %230 : vector<1xi32> to vector<1x1x1xi32>
      %232 = vector.extract %231[0, 0, 0] : i32 from vector<1x1x1xi32>
      %233 = vector.broadcast %232 : i32 to vector<1x64xi32>
      %234 = arith.cmpi eq, %5, %233 : vector<1x64xi32>
      %235 = arith.extui %234 : vector<1x64xi1> to vector<1x64xi32>
      %236 = arith.sitofp %235 : vector<1x64xi32> to vector<1x64xf32>
      scf.yield %220, %236, %202, %205, %208 : vector<1x64xf32>, vector<1x64xf32>, vector<16x1xf32>, vector<16x1xf32>, vector<16x1xf32>
    }
    %c16_i32_4 = arith.constant 16 : i32
    %15 = tpu.iota {dimensions = array<i32: 1>} : vector<16x3xi32>
    %c0_i32_5 = arith.constant 0 : i32
    %16 = vector.broadcast %c0_i32_5 : i32 to vector<16x3xi32>
    %17 = arith.cmpi eq, %15, %16 : vector<16x3xi32>
    %c1_i32_6 = arith.constant 1 : i32
    %18 = vector.broadcast %c1_i32_6 : i32 to vector<16x3xi32>
    %19 = arith.cmpi eq, %15, %18 : vector<16x3xi32>
    %20 = vector.shape_cast %14#3 : vector<16x1xf32> to vector<16x1xf32>
    %21 = vector.broadcast %20 : vector<16x1xf32> to vector<16x3xf32>
    %22 = vector.shape_cast %14#4 : vector<16x1xf32> to vector<16x1xf32>
    %23 = vector.broadcast %22 : vector<16x1xf32> to vector<16x3xf32>
    %24 = arith.select %19, %21, %23 : vector<16x3xi1>, vector<16x3xf32>
    %25 = vector.shape_cast %14#2 : vector<16x1xf32> to vector<16x1xf32>
    %26 = vector.broadcast %25 : vector<16x1xf32> to vector<16x3xf32>
    %27 = arith.select %17, %26, %24 : vector<16x3xi1>, vector<16x3xf32>
    %c0_7 = arith.constant 0 : index
    %c0_8 = arith.constant 0 : index
    %c0_9 = arith.constant 0 : index
    %28 = vector.load %arg3[%c0_7, %c0_8, %c0_9] : memref<1x16x3xf32, #tpu.memory_space<vmem>>, vector<1x16x3xf32>
    %29 = vector.shape_cast %28 : vector<1x16x3xf32> to vector<16x3xf32>
    %30 = vector.shape_cast %27 : vector<16x3xf32> to vector<1x16x3xf32>
    tpu.vector_store %arg3[%c0_7, %c0_8, %c0_9], %30 {strides = array<i32>} : memref<1x16x3xf32, #tpu.memory_space<vmem>>, vector<1x16x3xf32>,
    %31 = vector.broadcast %14#2 : vector<16x1xf32> to vector<16x64xf32>
    %32 = vector.broadcast %2 : vector<1x64xf32> to vector<16x64xf32>
    %33 = arith.subf %31, %32 : vector<16x64xf32>
    %34 = vector.broadcast %14#3 : vector<16x1xf32> to vector<16x64xf32>
    %35 = vector.broadcast %3 : vector<1x64xf32> to vector<16x64xf32>
    %36 = arith.subf %34, %35 : vector<16x64xf32>
    %37 = vector.broadcast %14#4 : vector<16x1xf32> to vector<16x64xf32>
    %38 = vector.broadcast %4 : vector<1x64xf32> to vector<16x64xf32>
    %39 = arith.subf %37, %38 : vector<16x64xf32>
    %40 = arith.mulf %33, %33 : vector<16x64xf32>
    %41 = arith.mulf %36, %36 : vector<16x64xf32>
    %42 = arith.addf %40, %41 : vector<16x64xf32>
    %43 = arith.mulf %39, %39 : vector<16x64xf32>
    %44 = arith.addf %42, %43 : vector<16x64xf32>
    %cst_10 = arith.constant 9.000000e-02 : f32
    %45 = vector.broadcast %cst_10 : f32 to vector<16x64xf32>
    %46 = arith.cmpf ole, %44, %45 : vector<16x64xf32>
    %47 = arith.extui %46 : vector<16x64xi1> to vector<16x64xi32>
    %48 = arith.sitofp %47 : vector<16x64xi32> to vector<16x64xf32>
    %49 = tpu.iota {dimensions = array<i32: 0>} : vector<64x64xi32>
    %50 = tpu.iota {dimensions = array<i32: 1>} : vector<64x64xi32>
    %51 = arith.cmpi slt, %49, %50 : vector<64x64xi32>
    %52 = arith.extui %51 : vector<64x64xi1> to vector<64x64xi32>
    %53 = arith.sitofp %52 : vector<64x64xi32> to vector<64x64xf32>
    %cst_11 = arith.constant dense<0.000000e+00> : vector<16x64xf32>
    %54 = tpu.matmul %48, %53, %cst_11 {dimension_numbers = #tpu.dot_dimension_numbers<[1], [0], [0], [1], [0, 0, 1, 1], [], []>} : vector<16x64xf32>, vector<64x64xf32>, vector<16x64xf32> -> vector<16x64xf32>
    %cst_12 = arith.constant dense<0.000000e+00> : vector<16xf32>
    %55 = vector.multi_reduction <add>, %48, %cst_12 [1] : vector<16x64xf32> to vector<16xf32>
    %56 = vector.shape_cast %55 : vector<16xf32> to vector<16x1xf32>
    %cst_13 = arith.constant 5.000000e-01 : f32
    %57 = vector.broadcast %cst_13 : f32 to vector<16x64xf32>
    %58 = arith.cmpf olt, %54, %57 : vector<16x64xf32>
    %59 = arith.andi %46, %58 : vector<16x64xi1>
    %60 = arith.extui %59 : vector<16x64xi1> to vector<16x64xi32>
    %61 = arith.sitofp %60 : vector<16x64xi32> to vector<16x64xf32>
    %cst_14 = arith.constant 1.000000e+00 : f32
    %62 = vector.broadcast %cst_14 : f32 to vector<16x64xf32>
    %63 = arith.subf %54, %62 : vector<16x64xf32>
    %64 = math.absf %63 : vector<16x64xf32>
    %cst_15 = arith.constant 5.000000e-01 : f32
    %65 = vector.broadcast %cst_15 : f32 to vector<16x64xf32>
    %66 = arith.cmpf olt, %64, %65 : vector<16x64xf32>
    %67 = arith.andi %46, %66 : vector<16x64xi1>
    %68 = arith.extui %67 : vector<16x64xi1> to vector<16x64xi32>
    %69 = arith.sitofp %68 : vector<16x64xi32> to vector<16x64xf32>
    %cst_16 = arith.constant 1.000000e+00 : f32
    %70 = vector.broadcast %cst_16 : f32 to vector<16x1xf32>
    %71 = arith.cmpf ogt, %56, %70 : vector<16x1xf32>
    %72 = vector.shape_cast %71 : vector<16x1xi1> to vector<16x1xi1>
    %73 = vector.broadcast %72 : vector<16x1xi1> to vector<16x64xi1>
    %74 = arith.select %73, %69, %61 : vector<16x64xi1>, vector<16x64xf32>
    %cst_17 = arith.constant 2.000000e+00 : f32
    %75 = vector.broadcast %cst_17 : f32 to vector<16x64xf32>
    %76 = arith.subf %54, %75 : vector<16x64xf32>
    %77 = math.absf %76 : vector<16x64xf32>
    %cst_18 = arith.constant 5.000000e-01 : f32
    %78 = vector.broadcast %cst_18 : f32 to vector<16x64xf32>
    %79 = arith.cmpf olt, %77, %78 : vector<16x64xf32>
    %80 = arith.andi %46, %79 : vector<16x64xi1>
    %81 = arith.extui %80 : vector<16x64xi1> to vector<16x64xi32>
    %82 = arith.sitofp %81 : vector<16x64xi32> to vector<16x64xf32>
    %cst_19 = arith.constant 2.000000e+00 : f32
    %83 = vector.broadcast %cst_19 : f32 to vector<16x1xf32>
    %84 = arith.cmpf ogt, %56, %83 : vector<16x1xf32>
    %85 = vector.shape_cast %84 : vector<16x1xi1> to vector<16x1xi1>
    %86 = vector.broadcast %85 : vector<16x1xi1> to vector<16x64xi1>
    %87 = arith.select %86, %82, %61 : vector<16x64xi1>, vector<16x64xf32>
    %cst_20 = arith.constant 3.000000e+00 : f32
    %88 = vector.broadcast %cst_20 : f32 to vector<16x64xf32>
    %89 = arith.subf %54, %88 : vector<16x64xf32>
    %90 = math.absf %89 : vector<16x64xf32>
    %cst_21 = arith.constant 5.000000e-01 : f32
    %91 = vector.broadcast %cst_21 : f32 to vector<16x64xf32>
    %92 = arith.cmpf olt, %90, %91 : vector<16x64xf32>
    %93 = arith.andi %46, %92 : vector<16x64xi1>
    %94 = arith.extui %93 : vector<16x64xi1> to vector<16x64xi32>
    %95 = arith.sitofp %94 : vector<16x64xi32> to vector<16x64xf32>
    %cst_22 = arith.constant 3.000000e+00 : f32
    %96 = vector.broadcast %cst_22 : f32 to vector<16x1xf32>
    %97 = arith.cmpf ogt, %56, %96 : vector<16x1xf32>
    %98 = vector.shape_cast %97 : vector<16x1xi1> to vector<16x1xi1>
    %99 = vector.broadcast %98 : vector<16x1xi1> to vector<16x64xi1>
    %100 = arith.select %99, %95, %61 : vector<16x64xi1>, vector<16x64xf32>
    %cst_23 = arith.constant 4.000000e+00 : f32
    %101 = vector.broadcast %cst_23 : f32 to vector<16x64xf32>
    %102 = arith.subf %54, %101 : vector<16x64xf32>
    %103 = math.absf %102 : vector<16x64xf32>
    %cst_24 = arith.constant 5.000000e-01 : f32
    %104 = vector.broadcast %cst_24 : f32 to vector<16x64xf32>
    %105 = arith.cmpf olt, %103, %104 : vector<16x64xf32>
    %106 = arith.andi %46, %105 : vector<16x64xi1>
    %107 = arith.extui %106 : vector<16x64xi1> to vector<16x64xi32>
    %108 = arith.sitofp %107 : vector<16x64xi32> to vector<16x64xf32>
    %cst_25 = arith.constant 4.000000e+00 : f32
    %109 = vector.broadcast %cst_25 : f32 to vector<16x1xf32>
    %110 = arith.cmpf ogt, %56, %109 : vector<16x1xf32>
    %111 = vector.shape_cast %110 : vector<16x1xi1> to vector<16x1xi1>
    %112 = vector.broadcast %111 : vector<16x1xi1> to vector<16x64xi1>
    %113 = arith.select %112, %108, %61 : vector<16x64xi1>, vector<16x64xf32>
    %cst_26 = arith.constant 5.000000e+00 : f32
    %114 = vector.broadcast %cst_26 : f32 to vector<16x64xf32>
    %115 = arith.subf %54, %114 : vector<16x64xf32>
    %116 = math.absf %115 : vector<16x64xf32>
    %cst_27 = arith.constant 5.000000e-01 : f32
    %117 = vector.broadcast %cst_27 : f32 to vector<16x64xf32>
    %118 = arith.cmpf olt, %116, %117 : vector<16x64xf32>
    %119 = arith.andi %46, %118 : vector<16x64xi1>
    %120 = arith.extui %119 : vector<16x64xi1> to vector<16x64xi32>
    %121 = arith.sitofp %120 : vector<16x64xi32> to vector<16x64xf32>
    %cst_28 = arith.constant 5.000000e+00 : f32
    %122 = vector.broadcast %cst_28 : f32 to vector<16x1xf32>
    %123 = arith.cmpf ogt, %56, %122 : vector<16x1xf32>
    %124 = vector.shape_cast %123 : vector<16x1xi1> to vector<16x1xi1>
    %125 = vector.broadcast %124 : vector<16x1xi1> to vector<16x64xi1>
    %126 = arith.select %125, %121, %61 : vector<16x64xi1>, vector<16x64xf32>
    %cst_29 = arith.constant 6.000000e+00 : f32
    %127 = vector.broadcast %cst_29 : f32 to vector<16x64xf32>
    %128 = arith.subf %54, %127 : vector<16x64xf32>
    %129 = math.absf %128 : vector<16x64xf32>
    %cst_30 = arith.constant 5.000000e-01 : f32
    %130 = vector.broadcast %cst_30 : f32 to vector<16x64xf32>
    %131 = arith.cmpf olt, %129, %130 : vector<16x64xf32>
    %132 = arith.andi %46, %131 : vector<16x64xi1>
    %133 = arith.extui %132 : vector<16x64xi1> to vector<16x64xi32>
    %134 = arith.sitofp %133 : vector<16x64xi32> to vector<16x64xf32>
    %cst_31 = arith.constant 6.000000e+00 : f32
    %135 = vector.broadcast %cst_31 : f32 to vector<16x1xf32>
    %136 = arith.cmpf ogt, %56, %135 : vector<16x1xf32>
    %137 = vector.shape_cast %136 : vector<16x1xi1> to vector<16x1xi1>
    %138 = vector.broadcast %137 : vector<16x1xi1> to vector<16x64xi1>
    %139 = arith.select %138, %134, %61 : vector<16x64xi1>, vector<16x64xf32>
    %cst_32 = arith.constant 7.000000e+00 : f32
    %140 = vector.broadcast %cst_32 : f32 to vector<16x64xf32>
    %141 = arith.subf %54, %140 : vector<16x64xf32>
    %142 = math.absf %141 : vector<16x64xf32>
    %cst_33 = arith.constant 5.000000e-01 : f32
    %143 = vector.broadcast %cst_33 : f32 to vector<16x64xf32>
    %144 = arith.cmpf olt, %142, %143 : vector<16x64xf32>
    %145 = arith.andi %46, %144 : vector<16x64xi1>
    %146 = arith.extui %145 : vector<16x64xi1> to vector<16x64xi32>
    %147 = arith.sitofp %146 : vector<16x64xi32> to vector<16x64xf32>
    %cst_34 = arith.constant 7.000000e+00 : f32
    %148 = vector.broadcast %cst_34 : f32 to vector<16x1xf32>
    %149 = arith.cmpf ogt, %56, %148 : vector<16x1xf32>
    %150 = vector.shape_cast %149 : vector<16x1xi1> to vector<16x1xi1>
    %151 = vector.broadcast %150 : vector<16x1xi1> to vector<16x64xi1>
    %152 = arith.select %151, %147, %61 : vector<16x64xi1>, vector<16x64xf32>
    %153 = tpu.concatenate %61, %74, %87, %100, %113, %126, %139, %152 in 0 : vector<16x64xf32>, vector<16x64xf32>, vector<16x64xf32>, vector<16x64xf32>, vector<16x64xf32>, vector<16x64xf32>, vector<16x64xf32>, vector<16x64xf32> -> vector<128x64xf32>
    %c0_35 = arith.constant 0 : index
    %c0_36 = arith.constant 0 : index
    %c0_37 = arith.constant 0 : index
    %154 = vector.load %arg2[%c0_35, %c0_36, %c0_37] : memref<1x64x16xf32, #tpu.memory_space<vmem>>, vector<1x64x16xf32>
    %155 = vector.shape_cast %154 : vector<1x64x16xf32> to vector<64x16xf32>
    %cst_38 = arith.constant dense<0.000000e+00> : vector<128x16xf32>
    %156 = tpu.matmul %153, %155, %cst_38 {dimension_numbers = #tpu.dot_dimension_numbers<[1], [0], [0], [1], [0, 0, 1, 1], [], []>} : vector<128x64xf32>, vector<64x16xf32>, vector<128x16xf32> -> vector<128x16xf32>
    %157 = vector.extract_strided_slice %156 {offsets = [0, 0], sizes = [16, 16], strides = [1, 1]} : vector<128x16xf32> to vector<16x16xf32>
    %c0_39 = arith.constant 0 : index
    %c0_40 = arith.constant 0 : index
    %c0_41 = arith.constant 0 : index
    %158 = vector.load %arg4[%c0_39, %c0_40, %c0_41] : memref<1x16x128xf32, #tpu.memory_space<vmem>>, vector<1x16x16xf32>
    %159 = vector.shape_cast %158 : vector<1x16x16xf32> to vector<16x16xf32>
    %160 = vector.shape_cast %157 : vector<16x16xf32> to vector<1x16x16xf32>
    tpu.vector_store %arg4[%c0_39, %c0_40, %c0_41], %160 {strides = array<i32>} : memref<1x16x128xf32, #tpu.memory_space<vmem>>, vector<1x16x16xf32>,
    %161 = vector.extract_strided_slice %156 {offsets = [16, 0], sizes = [16, 16], strides = [1, 1]} : vector<128x16xf32> to vector<16x16xf32>
    %c0_42 = arith.constant 0 : index
    %c0_43 = arith.constant 0 : index
    %c16 = arith.constant 16 : index
    %162 = vector.load %arg4[%c0_42, %c0_43, %c16] : memref<1x16x128xf32, #tpu.memory_space<vmem>>, vector<1x16x16xf32>
    %163 = vector.shape_cast %162 : vector<1x16x16xf32> to vector<16x16xf32>
    %164 = vector.shape_cast %161 : vector<16x16xf32> to vector<1x16x16xf32>
    tpu.vector_store %arg4[%c0_42, %c0_43, %c16], %164 {strides = array<i32>} : memref<1x16x128xf32, #tpu.memory_space<vmem>>, vector<1x16x16xf32>,
    %165 = vector.extract_strided_slice %156 {offsets = [32, 0], sizes = [16, 16], strides = [1, 1]} : vector<128x16xf32> to vector<16x16xf32>
    %c0_44 = arith.constant 0 : index
    %c0_45 = arith.constant 0 : index
    %c32 = arith.constant 32 : index
    %166 = vector.load %arg4[%c0_44, %c0_45, %c32] : memref<1x16x128xf32, #tpu.memory_space<vmem>>, vector<1x16x16xf32>
    %167 = vector.shape_cast %166 : vector<1x16x16xf32> to vector<16x16xf32>
    %168 = vector.shape_cast %165 : vector<16x16xf32> to vector<1x16x16xf32>
    tpu.vector_store %arg4[%c0_44, %c0_45, %c32], %168 {strides = array<i32>} : memref<1x16x128xf32, #tpu.memory_space<vmem>>, vector<1x16x16xf32>,
    %169 = vector.extract_strided_slice %156 {offsets = [48, 0], sizes = [16, 16], strides = [1, 1]} : vector<128x16xf32> to vector<16x16xf32>
    %c0_46 = arith.constant 0 : index
    %c0_47 = arith.constant 0 : index
    %c48 = arith.constant 48 : index
    %170 = vector.load %arg4[%c0_46, %c0_47, %c48] : memref<1x16x128xf32, #tpu.memory_space<vmem>>, vector<1x16x16xf32>
    %171 = vector.shape_cast %170 : vector<1x16x16xf32> to vector<16x16xf32>
    %172 = vector.shape_cast %169 : vector<16x16xf32> to vector<1x16x16xf32>
    tpu.vector_store %arg4[%c0_46, %c0_47, %c48], %172 {strides = array<i32>} : memref<1x16x128xf32, #tpu.memory_space<vmem>>, vector<1x16x16xf32>,
    %173 = vector.extract_strided_slice %156 {offsets = [64, 0], sizes = [16, 16], strides = [1, 1]} : vector<128x16xf32> to vector<16x16xf32>
    %c0_48 = arith.constant 0 : index
    %c0_49 = arith.constant 0 : index
    %c64 = arith.constant 64 : index
    %174 = vector.load %arg4[%c0_48, %c0_49, %c64] : memref<1x16x128xf32, #tpu.memory_space<vmem>>, vector<1x16x16xf32>
    %175 = vector.shape_cast %174 : vector<1x16x16xf32> to vector<16x16xf32>
    %176 = vector.shape_cast %173 : vector<16x16xf32> to vector<1x16x16xf32>
    tpu.vector_store %arg4[%c0_48, %c0_49, %c64], %176 {strides = array<i32>} : memref<1x16x128xf32, #tpu.memory_space<vmem>>, vector<1x16x16xf32>,
    %177 = vector.extract_strided_slice %156 {offsets = [80, 0], sizes = [16, 16], strides = [1, 1]} : vector<128x16xf32> to vector<16x16xf32>
    %c0_50 = arith.constant 0 : index
    %c0_51 = arith.constant 0 : index
    %c80 = arith.constant 80 : index
    %178 = vector.load %arg4[%c0_50, %c0_51, %c80] : memref<1x16x128xf32, #tpu.memory_space<vmem>>, vector<1x16x16xf32>
    %179 = vector.shape_cast %178 : vector<1x16x16xf32> to vector<16x16xf32>
    %180 = vector.shape_cast %177 : vector<16x16xf32> to vector<1x16x16xf32>
    tpu.vector_store %arg4[%c0_50, %c0_51, %c80], %180 {strides = array<i32>} : memref<1x16x128xf32, #tpu.memory_space<vmem>>, vector<1x16x16xf32>,
    %181 = vector.extract_strided_slice %156 {offsets = [96, 0], sizes = [16, 16], strides = [1, 1]} : vector<128x16xf32> to vector<16x16xf32>
    %c0_52 = arith.constant 0 : index
    %c0_53 = arith.constant 0 : index
    %c96 = arith.constant 96 : index
    %182 = vector.load %arg4[%c0_52, %c0_53, %c96] : memref<1x16x128xf32, #tpu.memory_space<vmem>>, vector<1x16x16xf32>
    %183 = vector.shape_cast %182 : vector<1x16x16xf32> to vector<16x16xf32>
    %184 = vector.shape_cast %181 : vector<16x16xf32> to vector<1x16x16xf32>
    tpu.vector_store %arg4[%c0_52, %c0_53, %c96], %184 {strides = array<i32>} : memref<1x16x128xf32, #tpu.memory_space<vmem>>, vector<1x16x16xf32>,
    %185 = vector.extract_strided_slice %156 {offsets = [112, 0], sizes = [16, 16], strides = [1, 1]} : vector<128x16xf32> to vector<16x16xf32>
    %c0_54 = arith.constant 0 : index
    %c0_55 = arith.constant 0 : index
    %c112 = arith.constant 112 : index
    %186 = vector.load %arg4[%c0_54, %c0_55, %c112] : memref<1x16x128xf32, #tpu.memory_space<vmem>>, vector<1x16x16xf32>
    %187 = vector.shape_cast %186 : vector<1x16x16xf32> to vector<16x16xf32>
    %188 = vector.shape_cast %185 : vector<16x16xf32> to vector<1x16x16xf32>
    tpu.vector_store %arg4[%c0_54, %c0_55, %c112], %188 {strides = array<i32>} : memref<1x16x128xf32, #tpu.memory_space<vmem>>, vector<1x16x16xf32>,
    return
  }
  func.func @transform_0(%arg0: i32) -> (i32, i32, i32) {
    %c0_i32 = arith.constant 0 : i32
    %c0_i32_0 = arith.constant 0 : i32
    %c0_i32_1 = arith.constant 0 : i32
    return %arg0, %c0_i32, %c0_i32_0 : i32, i32, i32
  }
  func.func @transform_1(%arg0: i32) -> (i32, i32, i32) {
    %c0_i32 = arith.constant 0 : i32
    %c0_i32_0 = arith.constant 0 : i32
    %c0_i32_1 = arith.constant 0 : i32
    return %arg0, %c0_i32, %c0_i32_0 : i32, i32, i32
  }
  func.func @transform_2(%arg0: i32) -> (i32, i32, i32) {
    %c0_i32 = arith.constant 0 : i32
    %c0_i32_0 = arith.constant 0 : i32
    %c0_i32_1 = arith.constant 0 : i32
    return %arg0, %c0_i32, %c0_i32_0 : i32, i32, i32
  }
  func.func @transform_3(%arg0: i32) -> (i32, i32, i32) {
    %c0_i32 = arith.constant 0 : i32
    %c0_i32_0 = arith.constant 0 : i32
    %c0_i32_1 = arith.constant 0 : i32
    return %arg0, %c0_i32, %c0_i32_0 : i32, i32, i32
  }
}

</mosaic_0001>

<llo_original>
// kernel: tpu_custom_call.1
$region0: #{tpu_custom_call.1}
  #allocation0 [shape = 'u32[]', space=smem, size = 0x4, offset = 0x4, fixed_abs, tag = 'smem constant byte address 0x4 - core index']
  #allocation1 [shape = 'u32[144,128]{1,0:T(1,128)}', space=vmem, size = 0x12000, scoped, tag = 'internal scratch']
  %s0 = inlined_call_operand.vmem [shape: f32[2,3,64], index: 0, kind: input, shape index: {}]
  %s1 = inlined_call_operand.vmem [shape: f32[2,64,16], index: 1, kind: input, shape index: {}]
  %s2 = inlined_call_operand.vmem [shape: f32[2,16,3], index: 2, kind: output, shape index: {0}]
  %s3 = inlined_call_operand.hbm [shape: f32[2,16,128], index: 3, kind: output, shape index: {1}]
  %4 = xla_tuple %s2, %s3
  %s5 = sld [smem:[#allocation0]]
  $region56: #{tpu_custom_call.1} parent=0
    _
  %s7 = ssub.s32 1, %s5
  %s8 = scalar_select 0, %s7, %s5
  $region1: #{tpu_custom_call.1} parent=0
    #allocation2 [shape = 'u8[16384]{0}', space=vmem, size = 0x4000, scoped, tag = 'output window, operand 1']
    #allocation3 [shape = 's32[2]{0}', space=sflag, size = 0x8, scoped, tag = 'scoped memory for tpu_custom_call.1']
    %9 = vsyncpa [#allocation3], 0
    %s10 = scalar_lea.sflag [#allocation3], 1
    %11 = vsyncpa %s10, 0
    loop: start=0, step=1, limit=4
    $region2: #{tpu_custom_call.1} parent=1 // loop_pre_header
      _
    $region3: #{tpu_custom_call.1} parent=1 // loop_header
      %s13 = sphi 0, %s17
      %p14 = scmp.ge.s32.totalorder %s13, 4
      %s23 = sphi 0, %s25
      %s26 = sphi 0, %s23
      %s27 = sphi 0, %s26
      %s43 = sphi 0, %s27
      %s49 = sphi 0, %s51
      %s52 = sphi 0, %s49
      %s53 = sphi 0, %s52
      %s69 = sphi 0, %s53
      %s75 = sphi 0, %s77
      %s78 = sphi 0, %s75
      %s79 = sphi 0, %s78
      %s95 = sphi 0, %s79
      %s101 = sphi 0, %s103
      %s104 = sphi 0, %s101
      %s105 = sphi 0, %s104
      %s121 = sphi 0, %s105
    $region4: #{tpu_custom_call.1} parent=1 // loop_header_branch
      %16 = sbr.rel (%p14) target = $region8
    $region5: #{tpu_custom_call.1} parent=1 // loop_body
      %s18 = ssub.s32 %s13, 1
      %s19 = ssub.s32 %s13, 2
      %s20 = sadd.s32 %s13, 1
      %s21 = ssub.s32 %s13, %s20
      %p22 = scmp.eq.s32.totalorder %s21, 0
      %s24 = sadd.s32 %s23, 1
      %s25 = scalar_select %p22, %s23, %s24
      %p28 = pneg %p22
      %p29 = scmp.eq.s32.totalorder %s13, 1
      %p30 = por %p28, %p29
      %p31 = scmp.ne.s32.totalorder %s23, %s26
      %p32 = scmp.eq.s32.totalorder %s13, 0
      %p33 = por %p31, %p32
      %p34 = scmp.ne.s32.totalorder %s23, %s26
      %p35 = scmp.eq.s32.totalorder %s18, 1
      %p36 = por %p34, %p35
      %p37 = scmp.ne.s32.totalorder %s26, %s27
      %p38 = scmp.eq.s32.totalorder %s18, 0
      %p39 = por %p37, %p38
      %p40 = scmp.ne.s32.totalorder %s26, %s27
      %p41 = scmp.eq.s32.totalorder %s19, 1
      %p42 = por %p40, %p41
      %p44 = scmp.ne.s32.totalorder %s27, %s43
      %p45 = scmp.eq.s32.totalorder %s19, 0
      %p46 = por %p44, %p45
      %s47 = ssub.s32 %s13, %s20
      %p48 = scmp.eq.s32.totalorder %s47, 0
      %s50 = sadd.s32 %s49, 1
      %s51 = scalar_select %p48, %s49, %s50
      %p54 = pneg %p48
      %p55 = scmp.eq.s32.totalorder %s13, 1
      %p56 = por %p54, %p55
      %p57 = scmp.ne.s32.totalorder %s49, %s52
      %p58 = scmp.eq.s32.totalorder %s13, 0
      %p59 = por %p57, %p58
      %p60 = scmp.ne.s32.totalorder %s49, %s52
      %p61 = scmp.eq.s32.totalorder %s18, 1
      %p62 = por %p60, %p61
      %p63 = scmp.ne.s32.totalorder %s52, %s53
      %p64 = scmp.eq.s32.totalorder %s18, 0
      %p65 = por %p63, %p64
      %p66 = scmp.ne.s32.totalorder %s52, %s53
      %p67 = scmp.eq.s32.totalorder %s19, 1
      %p68 = por %p66, %p67
      %p70 = scmp.ne.s32.totalorder %s53, %s69
      %p71 = scmp.eq.s32.totalorder %s19, 0
      %p72 = por %p70, %p71
      %s73 = ssub.s32 %s13, %s20
      %p74 = scmp.eq.s32.totalorder %s73, 0
      %s76 = sadd.s32 %s75, 1
      %s77 = scalar_select %p74, %s75, %s76
      %p80 = pneg %p74
      %p81 = scmp.eq.s32.totalorder %s13, 1
      %p82 = por %p80, %p81
      %p83 = scmp.ne.s32.totalorder %s75, %s78
      %p84 = scmp.eq.s32.totalorder %s13, 0
      %p85 = por %p83, %p84
      %p86 = scmp.ne.s32.totalorder %s75, %s78
      %p87 = scmp.eq.s32.totalorder %s18, 1
      %p88 = por %p86, %p87
      %p89 = scmp.ne.s32.totalorder %s78, %s79
      %p90 = scmp.eq.s32.totalorder %s18, 0
      %p91 = por %p89, %p90
      %p92 = scmp.ne.s32.totalorder %s78, %s79
      %p93 = scmp.eq.s32.totalorder %s19, 1
      %p94 = por %p92, %p93
      %p96 = scmp.ne.s32.totalorder %s79, %s95
      %p97 = scmp.eq.s32.totalorder %s19, 0
      %p98 = por %p96, %p97
      %s99 = ssub.s32 %s13, %s20
      %p100 = scmp.eq.s32.totalorder %s99, 0
      %s102 = sadd.s32 %s101, 1
      %s103 = scalar_select %p100, %s101, %s102
      %p106 = pneg %p100
      %p107 = scmp.eq.s32.totalorder %s13, 1
      %p108 = por %p106, %p107
      %p109 = scmp.ne.s32.totalorder %s101, %s104
      %p110 = scmp.eq.s32.totalorder %s13, 0
      %p111 = por %p109, %p110
      %p112 = scmp.ne.s32.totalorder %s101, %s104
      %p113 = scmp.eq.s32.totalorder %s18, 1
      %p114 = por %p112, %p113
      %p115 = scmp.ne.s32.totalorder %s104, %s105
      %p116 = scmp.eq.s32.totalorder %s18, 0
      %p117 = por %p115, %p116
      %p118 = scmp.ne.s32.totalorder %s104, %s105
      %p119 = scmp.eq.s32.totalorder %s19, 1
      %p120 = por %p118, %p119
      %p122 = scmp.ne.s32.totalorder %s105, %s121
      %p123 = scmp.eq.s32.totalorder %s19, 0
      %p124 = por %p122, %p123
      %p125 = scmp.le.s32.totalorder 1, %s13
      %p126 = scmp.lt.s32.totalorder %s13, 3
      %p127 = pnand %p125, %p126
      %p128 = pneg %p127
      // Predicated region
      $region9: #{tpu_custom_call.1} parent=5 // pred_check
        _
      $region10: #{tpu_custom_call.1} parent=5 // pred_check_branch
        %130 = sbr.rel (%p127) target = $region12
      $region11: #{tpu_custom_call.1} parent=5 // pred_region
        %s131 = ssub.s32 %s13, 1
      $region12: #{tpu_custom_call.1} parent=5 // pred_fallthru
        _
      %p132 = scmp.lt.s32.totalorder %s13, 2
      // Predicated region
      $region13: #{tpu_custom_call.1} parent=5 // pred_check
        %p133 = pneg %p132
      $region14: #{tpu_custom_call.1} parent=5 // pred_check_branch
        %135 = sbr.rel (%p133) target = $region16
      $region15: #{tpu_custom_call.1} parent=5 // pred_region
        // Predicated region
        $region17: #{tpu_custom_call.1} parent=15 // pred_check
          %p136 = pneg %p33
        $region18: #{tpu_custom_call.1} parent=15 // pred_check_branch
          %138 = sbr.rel (%p136) target = $region20
        $region19: #{tpu_custom_call.1} parent=15 // pred_region
          %p139 = scmp.lt.s32.totalorder %s13, 1
          %s140 = scalar_select %p139, %s13, 1
          %s141 = smul.addr %s140, 4
          %s142 = scalar_lea.vmem %s0, %s141
        $region20: #{tpu_custom_call.1} parent=15 // pred_fallthru
          _
        // Predicated region
        $region21: #{tpu_custom_call.1} parent=15 // pred_check
          %p143 = pneg %p59
        $region22: #{tpu_custom_call.1} parent=15 // pred_check_branch
          %145 = sbr.rel (%p143) target = $region24
        $region23: #{tpu_custom_call.1} parent=15 // pred_region
          %p146 = scmp.lt.s32.totalorder %s13, 1
          %s147 = scalar_select %p146, %s13, 1
          %s148 = smul.addr %s147, 8
          %s149 = smul.addr %s148, 8
          %s150 = scalar_lea.vmem %s1, %s149
        $region24: #{tpu_custom_call.1} parent=15 // pred_fallthru
          _
      $region16: #{tpu_custom_call.1} parent=5 // pred_fallthru
        _
      %p151 = scmp.le.s32.totalorder 1, %s13
      %p152 = scmp.lt.s32.totalorder %s13, 3
      %p153 = pnand %p151, %p152
      %p154 = pneg %p153
      // Predicated region
      $region25: #{tpu_custom_call.1} parent=5 // pred_check
        _
      $region26: #{tpu_custom_call.1} parent=5 // pred_check_branch
        %156 = sbr.rel (%p153) target = $region28
      $region27: #{tpu_custom_call.1} parent=5 // pred_region
        %s157 = ssub.s32 %s13, 1
        %p158 = scmp.lt.s32.totalorder %s18, 1
        %s159 = scalar_select %p158, %s18, 1
        %s160 = smul.addr %s159, 4
        %s161 = scalar_lea.vmem %s0, %s160
        %p162 = pneg %p39
        %p163 = pneg %p36
        %p164 = scmp.lt.s32.totalorder %s18, 1
        %s165 = scalar_select %p164, %s18, 1
        %s166 = smul.addr %s165, 8
        %s167 = smul.addr %s166, 8
        %s168 = scalar_lea.vmem %s1, %s167
        %p169 = pneg %p65
        %p170 = pneg %p62
        %p171 = pneg %p91
        %p172 = pneg %p88
        %p173 = scmp.lt.s32.totalorder %s18, 1
        %s174 = scalar_select %p173, %s18, 1
        %s175 = smul.addr %s174, 2
        %s176 = smul.addr %s175, 8
        %s177 = scalar_lea.vmem %s2, %s176
        %p178 = pneg %p117
        %p179 = pneg %p114
        %s180 = sand.u32 %s104, 1
        %s181 = scalar_lea.sflag [#allocation3], %s180
        %s182 = sand.u32 %s104, 1
        %s183 = smul.addr %s182, 16
        %s184 = scalar_lea.vmem [#allocation2], %s183
        %p185 = scmp.lt.s32.totalorder %s18, 1
        %s186 = scalar_select %p185, %s18, 1
        %s187 = smul.addr %s186, 4
        %s188 = scalar_lea.vmem %s0, %s187
        %p189 = scmp.lt.s32.totalorder %s18, 1
        %s190 = scalar_select %p189, %s18, 1
        %s191 = smul.addr %s190, 8
        %s192 = smul.addr %s191, 8
        %s193 = scalar_lea.vmem %s1, %s192
        %p194 = scmp.lt.s32.totalorder %s18, 1
        %s195 = scalar_select %p194, %s18, 1
        %s196 = smul.addr %s195, 2
        %s197 = smul.addr %s196, 8
        %s198 = scalar_lea.vmem %s2, %s197
        %v199 = vld [vmem:[%s188] sm:$0x7]
        %v200 = vlaneseq
        %v201 = vand.u32 %v200, 127
        %v202 = vlaneseq
        %v203 = vshrl.u32 %v202, 7
        %v204 = vadd.s32 %v203, 8
        %vm205 = vcmp.eq.s32.totalorder %v201, 0
        %v206 = vsel %vm205, 1, 0
        %v207 = vcvt.s32.f32 %v206
        loop: start=0, step=1, limit=16
        $region29: #{tpu_custom_call.1} parent=27 // loop_pre_header
          _
        $region30: #{tpu_custom_call.1} parent=27 // loop_header
          %s209 = sphi 0, %s213
          %p210 = scmp.ge.s32.totalorder %s209, 16
          %v214 = vphi 1e+10, %v267
          %v215 = vphi %v207, %v310
          %v216 = vphi 0.0, %v240
          %v217 = vphi 0.0, %v241
          %v218 = vphi 0.0, %v248
          %v219 = vphi 0.0, %v249
          %v220 = vphi 0.0, %v256
          %v221 = vphi 0.0, %v257
        $region31: #{tpu_custom_call.1} parent=27 // loop_header_branch
          %212 = sbr.rel (%p210) target = $region35
        $region32: #{tpu_custom_call.1} parent=27 // loop_body
          %v222 = vmul.f32 %v199, %v215
          %vm223 = vcmask 518144
          %v224 = vsel %vm223, %v222, 0.0
          %225 = vadd.xlane.f32.xlu0 %v224
          %v226 = vpop.xlane.xlu0 %225
          %v227 = vstv %s209
          %vm228 = vcmp.eq.s32.totalorder %v203, %v227
          %vm229 = vcmp.eq.s32.totalorder %v204, %v227
          %v230 = vsel %vm228, 1, 0
          %v231 = vsel %vm229, 1, 0
          %v232 = vcvt.s32.f32 %v230
          %v233 = vcvt.s32.f32 %v231
          %v234 = vlaneseq
          %v235 = vshrl.u32 %v234, 7
          %v236 = vsub.s32 0, %v235
          %v237 = vrot.slane %v226, %v236
          %v238 = vmul.f32 %v237, %v232
          %v239 = vmul.f32 %v237, %v233
          %v240 = vadd.f32 %v216, %v238
          %v241 = vadd.f32 %v217, %v239
          %v242 = vlaneseq
          %v243 = vshrl.u32 %v242, 7
          %v244 = vsub.s32 1, %v243
          %v245 = vrot.slane %v226, %v244
          %v246 = vmul.f32 %v245, %v232
          %v247 = vmul.f32 %v245, %v233
          %v248 = vadd.f32 %v218, %v246
          %v249 = vadd.f32 %v219, %v247
          %v250 = vlaneseq
          %v251 = vshrl.u32 %v250, 7
          %v252 = vsub.s32 2, %v251
          %v253 = vrot.slane %v226, %v252
          %v254 = vmul.f32 %v253, %v232
          %v255 = vmul.f32 %v253, %v233
          %v256 = vadd.f32 %v220, %v254
          %v257 = vadd.f32 %v221, %v255
          %v258 = vsub.f32 %v199, %v226
          %v259 = vmul.f32 %v258, %v258
          %v261 = vrot.slane %v259, 1
          %v263 = vadd.f32 %v259, %v261
          %v264 = vrot.slane %v259, 2
          %v266 = vadd.f32 %v263, %v264
          %v267 = vmin.f32 %v214, %v266
          %vm268 = vcmask 516096
          %v269 = vsel %vm268, %v267, -inf
          %270 = vmax.xlane.f32.xlu0 %v269
          %v271 = vpop.xlane.xlu0 %270
          %v272 = vrot.slane %v271, 4
          %v273 = vmax.f32 %v271, %v272
          %v274 = vrot.slane %v273, 2
          %v275 = vmax.f32 %v273, %v274
          %v276 = vrot.slane %v275, 1
          %v277 = vmax.f32 %v275, %v276
          %s278 = vtos %v277
          %v279 = vstv %s278
          %vm280 = vcmp.eq.f32.partialorder %v267, %v279
          %v281 = vsel %vm280, %v201, 64
          %v282 = vsel %vm268, %v281, 2147483647
          %v283 = vand.u32 %v282, 65535
          %v284 = vshra.s32 %v282, 16
          %v285 = vcvt.s32.f32 %v283
          %v286 = vcvt.s32.f32 %v284
          %287 = vmin.xlane.f32.xlu0 %v286
          %v288 = vpop.xlane.xlu0 %287
          %vm289 = vcmp.eq.f32.partialorder %v286, %v288
          %v290 = vsel %vm289, %v285, inf
          %291 = vmin.xlane.f32.xlu0 %v290
          %v292 = vpop.xlane.xlu0 %291
          %v293 = vcvt.f32.s32 %v292
          %v294 = vcvt.f32.s32 %v288
          %v295 = vshll.u32 %v294, 16
          %v296 = vadd.s32 %v295, %v293
          %v297 = vrot.slane %v296, 4
          %vm298 = vcmp.lt.s32.totalorder %v296, %v297
          %v299 = vsel %vm298, %v296, %v297
          %v300 = vrot.slane %v299, 2
          %vm301 = vcmp.lt.s32.totalorder %v299, %v300
          %v302 = vsel %vm301, %v299, %v300
          %v303 = vrot.slane %v302, 1
          %vm304 = vcmp.lt.s32.totalorder %v302, %v303
          %v305 = vsel %vm304, %v302, %v303
          %s306 = vtos %v305
          %v307 = vstv %s306
          %vm308 = vcmp.eq.s32.totalorder %v201, %v307
          %v309 = vsel %vm308, 1, 0
          %v310 = vcvt.s32.f32 %v309
        $region33: #{tpu_custom_call.1} parent=27 // loop_footer
          %s213 = sadd.s32 1, %s209
        $region34: #{tpu_custom_call.1} parent=27 // loop_footer_branch
          %208 = sbr.rel target = $region30
        $region35: #{tpu_custom_call.1} parent=27 // loop_exit
          _
        %vm311 = vcmp.eq.s32.totalorder %v201, 1
        %v312 = vsel %vm311, %v218, %v220
        %v313 = vsel %vm311, %v219, %v221
        %v314 = vsel %vm205, %v216, %v312
        %v315 = vsel %vm205, %v217, %v313
        %vm316 = vcmask 23552
        %317 = vst.msk [vmem:[%s198] sm:$0xff] %vm316, %v314
        %318 = vst.msk [vmem:[%s198 + $0x8] sm:$0xff] %vm316, %v315
        %v319 = vlaneseq
        %v320 = vshrl.u32 %v319, 7
        %v321 = vsub.s32 0, %v320
        %v322 = vrot.slane %v199, %v321
        %v323 = vsub.f32 %v216, %v322
        %v324 = vsub.f32 %v217, %v322
        %v325 = vlaneseq
        %v326 = vshrl.u32 %v325, 7
        %v327 = vsub.s32 1, %v326
        %v328 = vrot.slane %v199, %v327
        %v329 = vsub.f32 %v218, %v328
        %v330 = vsub.f32 %v219, %v328
        %v331 = vlaneseq
        %v332 = vshrl.u32 %v331, 7
        %v333 = vsub.s32 2, %v332
        %v334 = vrot.slane %v199, %v333
        %v335 = vsub.f32 %v220, %v334
        %v336 = vsub.f32 %v221, %v334
        %v337 = vmul.f32 %v323, %v323
        %v338 = vmul.f32 %v324, %v324
        %v339 = vmul.f32 %v329, %v329
        %v340 = vmul.f32 %v330, %v330
        %v341 = vadd.f32 %v337, %v339
        %v342 = vadd.f32 %v338, %v340
        %v343 = vmul.f32 %v335, %v335
        %v344 = vmul.f32 %v336, %v336
        %v345 = vadd.f32 %v341, %v343
        %v346 = vadd.f32 %v342, %v344
        %vm347 = vcmp.le.f32.partialorder %v345, 0.09
        %vm348 = vcmp.le.f32.partialorder %v346, 0.09
        %v349 = vsel %vm347, 1, 0
        %v350 = vsel %vm348, 1, 0
        %v351 = vcvt.s32.f32 %v349
        %v352 = vcvt.s32.f32 %v350
        %v353 = vadd.s32 %v203, 16
        %v354 = vadd.s32 %v203, 24
        %v355 = vadd.s32 %v203, 32
        %v356 = vadd.s32 %v203, 40
        %v357 = vadd.s32 %v203, 48
        %v358 = vadd.s32 %v203, 56
        %vm359 = vcmp.lt.s32.totalorder %v203, %v201
        %vm360 = vcmp.lt.s32.totalorder %v204, %v201
        %vm361 = vcmp.lt.s32.totalorder %v353, %v201
        %vm362 = vcmp.lt.s32.totalorder %v354, %v201
        %vm363 = vcmp.lt.s32.totalorder %v355, %v201
        %vm364 = vcmp.lt.s32.totalorder %v356, %v201
        %vm365 = vcmp.lt.s32.totalorder %v357, %v201
        %vm366 = vcmp.lt.s32.totalorder %v358, %v201
        %v367 = vsel %vm359, 1, 0
        %v368 = vsel %vm360, 1, 0
        %v369 = vsel %vm361, 1, 0
        %v370 = vsel %vm362, 1, 0
        %v371 = vsel %vm363, 1, 0
        %v372 = vsel %vm364, 1, 0
        %v373 = vsel %vm365, 1, 0
        %v374 = vsel %vm366, 1, 0
        %v375 = vcvt.s32.f32 %v367
        %v376 = vcvt.s32.f32 %v368
        %v377 = vcvt.s32.f32 %v369
        %v378 = vcvt.s32.f32 %v370
        %v379 = vcvt.s32.f32 %v371
        %v380 = vcvt.s32.f32 %v372
        %v381 = vcvt.s32.f32 %v373
        %v382 = vcvt.s32.f32 %v374
        %vm383 = vcmask 523264
        %v385 = vsel %vm383, %v351, 0
        %v388 = vsel %vm383, %v352, 0
        %390 = vmatprep.subr.mxu0 0.0
        %391 = vmatpush1.msra.mxu0 %v375
        %392 = vmatprep.subr.mxu0 0.0
        %393 = vmatpush1.msra.mxu0 %v376
        %394 = vmatprep.subr.mxu0 0.0
        %395 = vmatpush1.msra.mxu0 %v377
        %396 = vmatprep.subr.mxu0 0.0
        %397 = vmatpush1.msra.mxu0 %v378
        %398 = vmatprep.subr.mxu0 0.0
        %399 = vmatpush1.msra.mxu0 %v379
        %400 = vmatprep.subr.mxu0 0.0
        %401 = vmatpush1.msra.mxu0 %v380
        %402 = vmatprep.subr.mxu0 0.0
        %403 = vmatpush1.msra.mxu0 %v381
        %404 = vmatprep.subr.mxu0 0.0
        %405 = vmatpush1.msra.mxu0 %v382
        %406 = vmatprep.subr.mxu0 0.0
        %407 = vmatpush1.msra.mxu0 0.0
        %408 = vmatprep.subr.mxu0 0.0
        %409 = vmatpush1.msra.mxu0 0.0
        %410 = vmatprep.subr.mxu0 0.0
        %411 = vmatpush1.msra.mxu0 0.0
        %412 = vmatprep.subr.mxu0 0.0
        %413 = vmatpush1.msra.mxu0 0.0
        %414 = vmatprep.subr.mxu0 0.0
        %415 = vmatpush1.msra.mxu0 0.0
        %416 = vmatprep.subr.mxu0 0.0
        %417 = vmatpush1.msra.mxu0 0.0
        %418 = vmatprep.subr.mxu0 0.0
        %419 = vmatpush1.msra.mxu0 0.0
        %420 = vmatprep.subr.mxu0 0.0
        %421 = vmatpush1.msra.mxu0 0.0
        %422 = vmatprep.subr.mxu0 0.0
        %423 = vmatpush1.msra.mxu0 0.0
        %424 = vmatprep.subr.mxu0 0.0
        %425 = vmatpush1.msra.mxu0 0.0
        %426 = vmatprep.subr.mxu0 0.0
        %427 = vmatpush1.msra.mxu0 0.0
        %428 = vmatprep.subr.mxu0 0.0
        %429 = vmatpush1.msra.mxu0 0.0
        %430 = vmatprep.subr.mxu0 0.0
        %431 = vmatpush1.msra.mxu0 0.0
        %432 = vmatprep.subr.mxu0 0.0
        %433 = vmatpush1.msra.mxu0 0.0
        %434 = vmatprep.subr.mxu0 0.0
        %435 = vmatpush1.msra.mxu0 0.0
        %436 = vmatprep.subr.mxu0 0.0
        %437 = vmatpush1.msra.mxu0 0.0
        %438 = vmatprep.subr.mxu0 0.0
        %439 = vmatpush1.msra.mxu0 0.0
        %440 = vmatprep.subr.mxu0 0.0
        %441 = vmatpush1.msra.mxu0 0.0
        %442 = vmatprep.subr.mxu0 0.0
        %443 = vmatpush1.msra.mxu0 0.0
        %444 = vmatprep.subr.mxu0 0.0
        %445 = vmatpush1.msra.mxu0 0.0
        %446 = vmatprep.subr.mxu0 0.0
        %447 = vmatpush1.msra.mxu0 0.0
        %448 = vmatprep.subr.mxu0 0.0
        %449 = vmatpush1.msra.mxu0 0.0
        %450 = vmatprep.subr.mxu0 0.0
        %451 = vmatpush1.msra.mxu0 0.0
        %452 = vmatprep.subr.mxu0 0.0
        %453 = vmatpush1.msra.mxu0 0.0
        %454 = vmatprep.mubr.f32.mxu0 0.0
        %455 = vmatmul.mubr.f32.gmra.mrb[0].mxu0 %v385
        %v456 = vpop.f32.mrb[0].mxu0
        %v457 = vadd.f32 0.0, %v456
        %v458 = vpop.f32.mrb[0].mxu0
        %459 = vmatprep.mubr.f32.mxu0 0.0
        %460 = vmatmul.mubr.f32.gmra.mrb[0].mxu0 %v388
        %v461 = vpop.f32.mrb[0].mxu0
        %v462 = vadd.f32 0.0, %v461
        %v463 = vpop.f32.mrb[0].mxu0
        %464 = vdwg.mxu0
        %v465 = vsel %vm383, %v351, 0.0
        %466 = vadd.xlane.f32.xlu0 %v465
        %v467 = vpop.xlane.xlu0 %466
        %v468 = vsel %vm383, %v352, 0.0
        %469 = vadd.xlane.f32.xlu0 %v468
        %v470 = vpop.xlane.xlu0 %469
        %vm471 = vcmp.lt.f32.partialorder %v457, 0.5
        %vm472 = vcmp.lt.f32.partialorder %v462, 0.5
        %vm473 = vmand %vm347, %vm471
        %vm474 = vmand %vm348, %vm472
        %v475 = vsel %vm473, 1, 0
        %v476 = vsel %vm474, 1, 0
        %v477 = vcvt.s32.f32 %v475
        %v478 = vcvt.s32.f32 %v476
        %v479 = vsub.f32 %v457, 1.0
        %v480 = vsub.f32 %v462, 1.0
        %v481 = vand.u32 2147483647, %v479
        %v482 = vand.u32 2147483647, %v480
        %vm483 = vcmp.lt.f32.partialorder %v481, 0.5
        %vm484 = vcmp.lt.f32.partialorder %v482, 0.5
        %vm485 = vmand %vm347, %vm483
        %vm486 = vmand %vm348, %vm484
        %v487 = vsel %vm485, 1, 0
        %v488 = vsel %vm486, 1, 0
        %v489 = vcvt.s32.f32 %v487
        %v490 = vcvt.s32.f32 %v488
        %vm491 = vcmp.gt.f32.partialorder %v467, 1.0
        %vm492 = vcmp.gt.f32.partialorder %v470, 1.0
        %v493 = vsel %vm491, 1, 0
        %v494 = vsel %vm492, 1, 0
        %vm495 = vcmp.eq.s32.totalorder %v493, 1
        %vm496 = vcmp.eq.s32.totalorder %v494, 1
        %v497 = vsel %vm495, %v489, %v477
        %v498 = vsel %vm496, %v490, %v478
        %v499 = vsub.f32 %v457, 2.0
        %v500 = vsub.f32 %v462, 2.0
        %v501 = vand.u32 2147483647, %v499
        %v502 = vand.u32 2147483647, %v500
        %vm503 = vcmp.lt.f32.partialorder %v501, 0.5
        %vm504 = vcmp.lt.f32.partialorder %v502, 0.5
        %vm505 = vmand %vm347, %vm503
        %vm506 = vmand %vm348, %vm504
        %v507 = vsel %vm505, 1, 0
        %v508 = vsel %vm506, 1, 0
        %v509 = vcvt.s32.f32 %v507
        %v510 = vcvt.s32.f32 %v508
        %vm511 = vcmp.gt.f32.partialorder %v467, 2.0
        %vm512 = vcmp.gt.f32.partialorder %v470, 2.0
        %v513 = vsel %vm511, 1, 0
        %v514 = vsel %vm512, 1, 0
        %vm515 = vcmp.eq.s32.totalorder %v513, 1
        %vm516 = vcmp.eq.s32.totalorder %v514, 1
        %v517 = vsel %vm515, %v509, %v477
        %v518 = vsel %vm516, %v510, %v478
        %v519 = vsub.f32 %v457, 3.0
        %v520 = vsub.f32 %v462, 3.0
        %v521 = vand.u32 2147483647, %v519
        %v522 = vand.u32 2147483647, %v520
        %vm523 = vcmp.lt.f32.partialorder %v521, 0.5
        %vm524 = vcmp.lt.f32.partialorder %v522, 0.5
        %vm525 = vmand %vm347, %vm523
        %vm526 = vmand %vm348, %vm524
        %v527 = vsel %vm525, 1, 0
        %v528 = vsel %vm526, 1, 0
        %v529 = vcvt.s32.f32 %v527
        %v530 = vcvt.s32.f32 %v528
        %vm531 = vcmp.gt.f32.partialorder %v467, 3.0
        %vm532 = vcmp.gt.f32.partialorder %v470, 3.0
        %v533 = vsel %vm531, 1, 0
        %v534 = vsel %vm532, 1, 0
        %vm535 = vcmp.eq.s32.totalorder %v533, 1
        %vm536 = vcmp.eq.s32.totalorder %v534, 1
        %v537 = vsel %vm535, %v529, %v477
        %v538 = vsel %vm536, %v530, %v478
        %v539 = vsub.f32 %v457, 4.0
        %v540 = vsub.f32 %v462, 4.0
        %v541 = vand.u32 2147483647, %v539
        %v542 = vand.u32 2147483647, %v540
        %vm543 = vcmp.lt.f32.partialorder %v541, 0.5
        %vm544 = vcmp.lt.f32.partialorder %v542, 0.5
        %vm545 = vmand %vm347, %vm543
        %vm546 = vmand %vm348, %vm544
        %v547 = vsel %vm545, 1, 0
        %v548 = vsel %vm546, 1, 0
        %v549 = vcvt.s32.f32 %v547
        %v550 = vcvt.s32.f32 %v548
        %vm551 = vcmp.gt.f32.partialorder %v467, 4.0
        %vm552 = vcmp.gt.f32.partialorder %v470, 4.0
        %v553 = vsel %vm551, 1, 0
        %v554 = vsel %vm552, 1, 0
        %vm555 = vcmp.eq.s32.totalorder %v553, 1
        %vm556 = vcmp.eq.s32.totalorder %v554, 1
        %v557 = vsel %vm555, %v549, %v477
        %v558 = vsel %vm556, %v550, %v478
        %v559 = vsub.f32 %v457, 5.0
        %v560 = vsub.f32 %v462, 5.0
        %v561 = vand.u32 2147483647, %v559
        %v562 = vand.u32 2147483647, %v560
        %vm563 = vcmp.lt.f32.partialorder %v561, 0.5
        %vm564 = vcmp.lt.f32.partialorder %v562, 0.5
        %vm565 = vmand %vm347, %vm563
        %vm566 = vmand %vm348, %vm564
        %v567 = vsel %vm565, 1, 0
        %v568 = vsel %vm566, 1, 0
        %v569 = vcvt.s32.f32 %v567
        %v570 = vcvt.s32.f32 %v568
        %vm571 = vcmp.gt.f32.partialorder %v467, 5.0
        %vm572 = vcmp.gt.f32.partialorder %v470, 5.0
        %v573 = vsel %vm571, 1, 0
        %v574 = vsel %vm572, 1, 0
        %vm575 = vcmp.eq.s32.totalorder %v573, 1
        %vm576 = vcmp.eq.s32.totalorder %v574, 1
        %v577 = vsel %vm575, %v569, %v477
        %v578 = vsel %vm576, %v570, %v478
        %v579 = vsub.f32 %v457, 6.0
        %v580 = vsub.f32 %v462, 6.0
        %v581 = vand.u32 2147483647, %v579
        %v582 = vand.u32 2147483647, %v580
        %vm583 = vcmp.lt.f32.partialorder %v581, 0.5
        %vm584 = vcmp.lt.f32.partialorder %v582, 0.5
        %vm585 = vmand %vm347, %vm583
        %vm586 = vmand %vm348, %vm584
        %v587 = vsel %vm585, 1, 0
        %v588 = vsel %vm586, 1, 0
        %v589 = vcvt.s32.f32 %v587
        %v590 = vcvt.s32.f32 %v588
        %vm591 = vcmp.gt.f32.partialorder %v467, 6.0
        %vm592 = vcmp.gt.f32.partialorder %v470, 6.0
        %v593 = vsel %vm591, 1, 0
        %v594 = vsel %vm592, 1, 0
        %vm595 = vcmp.eq.s32.totalorder %v593, 1
        %vm596 = vcmp.eq.s32.totalorder %v594, 1
        %v597 = vsel %vm595, %v589, %v477
        %v598 = vsel %vm596, %v590, %v478
        %v599 = vsub.f32 %v457, 7.0
        %v600 = vsub.f32 %v462, 7.0
        %v601 = vand.u32 2147483647, %v599
        %v602 = vand.u32 2147483647, %v600
        %vm603 = vcmp.lt.f32.partialorder %v601, 0.5
        %vm604 = vcmp.lt.f32.partialorder %v602, 0.5
        %vm605 = vmand %vm347, %vm603
        %vm606 = vmand %vm348, %vm604
        %v607 = vsel %vm605, 1, 0
        %v608 = vsel %vm606, 1, 0
        %v609 = vcvt.s32.f32 %v607
        %v610 = vcvt.s32.f32 %v608
        %vm611 = vcmp.gt.f32.partialorder %v467, 7.0
        %vm612 = vcmp.gt.f32.partialorder %v470, 7.0
        %v613 = vsel %vm611, 1, 0
        %v614 = vsel %vm612, 1, 0
        %vm615 = vcmp.eq.s32.totalorder %v613, 1
        %vm616 = vcmp.eq.s32.totalorder %v614, 1
        %v617 = vsel %vm615, %v609, %v477
        %v618 = vsel %vm616, %v610, %v478
        %v619 = vld [vmem:[%s193] sm:$0xff]
        %v620 = vld [vmem:[%s193 + $0x8] sm:$0xff]
        %v621 = vld [vmem:[%s193 + $0x10] sm:$0xff]
        %v622 = vld [vmem:[%s193 + $0x18] sm:$0xff]
        %v623 = vld [vmem:[%s193 + $0x20] sm:$0xff]
        %v624 = vld [vmem:[%s193 + $0x28] sm:$0xff]
        %v625 = vld [vmem:[%s193 + $0x30] sm:$0xff]
        %v626 = vld [vmem:[%s193 + $0x38] sm:$0xff]
        %v628 = vsel %vm383, %v477, 0
        %v631 = vsel %vm383, %v478, 0
        %v634 = vsel %vm383, %v497, 0
        %v637 = vsel %vm383, %v498, 0
        %v640 = vsel %vm383, %v517, 0
        %v643 = vsel %vm383, %v518, 0
        %v646 = vsel %vm383, %v537, 0
        %v649 = vsel %vm383, %v538, 0
        %v652 = vsel %vm383, %v557, 0
        %v655 = vsel %vm383, %v558, 0
        %v658 = vsel %vm383, %v577, 0
        %v661 = vsel %vm383, %v578, 0
        %v664 = vsel %vm383, %v597, 0
        %v667 = vsel %vm383, %v598, 0
        %v670 = vsel %vm383, %v617, 0
        %v673 = vsel %vm383, %v618, 0
        %675 = vmatprep.subr.mxu0 0.0
        %676 = vmatpush1.msra.mxu0 %v619
        %677 = vmatprep.subr.mxu0 0.0
        %678 = vmatpush1.msra.mxu0 %v620
        %679 = vmatprep.subr.mxu0 0.0
        %680 = vmatpush1.msra.mxu0 %v621
        %681 = vmatprep.subr.mxu0 0.0
        %682 = vmatpush1.msra.mxu0 %v622
        %683 = vmatprep.subr.mxu0 0.0
        %684 = vmatpush1.msra.mxu0 %v623
        %685 = vmatprep.subr.mxu0 0.0
        %686 = vmatpush1.msra.mxu0 %v624
        %687 = vmatprep.subr.mxu0 0.0
        %688 = vmatpush1.msra.mxu0 %v625
        %689 = vmatprep.subr.mxu0 0.0
        %690 = vmatpush1.msra.mxu0 %v626
        %691 = vmatprep.subr.mxu0 0.0
        %692 = vmatpush1.msra.mxu0 0.0
        %693 = vmatprep.subr.mxu0 0.0
        %694 = vmatpush1.msra.mxu0 0.0
        %695 = vmatprep.subr.mxu0 0.0
        %696 = vmatpush1.msra.mxu0 0.0
        %697 = vmatprep.subr.mxu0 0.0
        %698 = vmatpush1.msra.mxu0 0.0
        %699 = vmatprep.subr.mxu0 0.0
        %700 = vmatpush1.msra.mxu0 0.0
        %701 = vmatprep.subr.mxu0 0.0
        %702 = vmatpush1.msra.mxu0 0.0
        %703 = vmatprep.subr.mxu0 0.0
        %704 = vmatpush1.msra.mxu0 0.0
        %705 = vmatprep.subr.mxu0 0.0
        %706 = vmatpush1.msra.mxu0 0.0
        %707 = vmatprep.subr.mxu0 0.0
        %708 = vmatpush1.msra.mxu0 0.0
        %709 = vmatprep.subr.mxu0 0.0
        %710 = vmatpush1.msra.mxu0 0.0
        %711 = vmatprep.subr.mxu0 0.0
        %712 = vmatpush1.msra.mxu0 0.0
        %713 = vmatprep.subr.mxu0 0.0
        %714 = vmatpush1.msra.mxu0 0.0
        %715 = vmatprep.subr.mxu0 0.0
        %716 = vmatpush1.msra.mxu0 0.0
        %717 = vmatprep.subr.mxu0 0.0
        %718 = vmatpush1.msra.mxu0 0.0
        %719 = vmatprep.subr.mxu0 0.0
        %720 = vmatpush1.msra.mxu0 0.0
        %721 = vmatprep.subr.mxu0 0.0
        %722 = vmatpush1.msra.mxu0 0.0
        %723 = vmatprep.subr.mxu0 0.0
        %724 = vmatpush1.msra.mxu0 0.0
        %725 = vmatprep.subr.mxu0 0.0
        %726 = vmatpush1.msra.mxu0 0.0
        %727 = vmatprep.subr.mxu0 0.0
        %728 = vmatpush1.msra.mxu0 0.0
        %729 = vmatprep.subr.mxu0 0.0
        %730 = vmatpush1.msra.mxu0 0.0
        %731 = vmatprep.subr.mxu0 0.0
        %732 = vmatpush1.msra.mxu0 0.0
        %733 = vmatprep.subr.mxu0 0.0
        %734 = vmatpush1.msra.mxu0 0.0
        %735 = vmatprep.subr.mxu0 0.0
        %736 = vmatpush1.msra.mxu0 0.0
        %737 = vmatprep.subr.mxu0 0.0
        %738 = vmatpush1.msra.mxu0 0.0
        %739 = vmatprep.mubr.f32.mxu0 0.0
        %740 = vmatmul.mubr.f32.gmra.mrb[0].mxu0 %v628
        %v741 = vpop.f32.mrb[0].mxu0
        %v742 = vadd.f32 0.0, %v741
        %v743 = vpop.f32.mrb[0].mxu0
        %744 = vmatprep.mubr.f32.mxu0 0.0
        %745 = vmatmul.mubr.f32.gmra.mrb[0].mxu0 %v631
        %v746 = vpop.f32.mrb[0].mxu0
        %v747 = vadd.f32 0.0, %v746
        %v748 = vpop.f32.mrb[0].mxu0
        %749 = vmatprep.mubr.f32.mxu0 0.0
        %750 = vmatmul.mubr.f32.gmra.mrb[0].mxu0 %v634
        %v751 = vpop.f32.mrb[0].mxu0
        %v752 = vadd.f32 0.0, %v751
        %v753 = vpop.f32.mrb[0].mxu0
        %754 = vmatprep.mubr.f32.mxu0 0.0
        %755 = vmatmul.mubr.f32.gmra.mrb[0].mxu0 %v637
        %v756 = vpop.f32.mrb[0].mxu0
        %v757 = vadd.f32 0.0, %v756
        %v758 = vpop.f32.mrb[0].mxu0
        %759 = vmatprep.mubr.f32.mxu0 0.0
        %760 = vmatmul.mubr.f32.gmra.mrb[0].mxu0 %v640
        %v761 = vpop.f32.mrb[0].mxu0
        %v762 = vadd.f32 0.0, %v761
        %v763 = vpop.f32.mrb[0].mxu0
        %764 = vmatprep.mubr.f32.mxu0 0.0
        %765 = vmatmul.mubr.f32.gmra.mrb[0].mxu0 %v643
        %v766 = vpop.f32.mrb[0].mxu0
        %v767 = vadd.f32 0.0, %v766
        %v768 = vpop.f32.mrb[0].mxu0
        %769 = vmatprep.mubr.f32.mxu0 0.0
        %770 = vmatmul.mubr.f32.gmra.mrb[0].mxu0 %v646
        %v771 = vpop.f32.mrb[0].mxu0
        %v772 = vadd.f32 0.0, %v771
        %v773 = vpop.f32.mrb[0].mxu0
        %774 = vmatprep.mubr.f32.mxu0 0.0
        %775 = vmatmul.mubr.f32.gmra.mrb[0].mxu0 %v649
        %v776 = vpop.f32.mrb[0].mxu0
        %v777 = vadd.f32 0.0, %v776
        %v778 = vpop.f32.mrb[0].mxu0
        %779 = vmatprep.mubr.f32.mxu0 0.0
        %780 = vmatmul.mubr.f32.gmra.mrb[0].mxu0 %v652
        %v781 = vpop.f32.mrb[0].mxu0
        %v782 = vadd.f32 0.0, %v781
        %v783 = vpop.f32.mrb[0].mxu0
        %784 = vmatprep.mubr.f32.mxu0 0.0
        %785 = vmatmul.mubr.f32.gmra.mrb[0].mxu0 %v655
        %v786 = vpop.f32.mrb[0].mxu0
        %v787 = vadd.f32 0.0, %v786
        %v788 = vpop.f32.mrb[0].mxu0
        %789 = vmatprep.mubr.f32.mxu0 0.0
        %790 = vmatmul.mubr.f32.gmra.mrb[0].mxu0 %v658
        %v791 = vpop.f32.mrb[0].mxu0
        %v792 = vadd.f32 0.0, %v791
        %v793 = vpop.f32.mrb[0].mxu0
        %794 = vmatprep.mubr.f32.mxu0 0.0
        %795 = vmatmul.mubr.f32.gmra.mrb[0].mxu0 %v661
        %v796 = vpop.f32.mrb[0].mxu0
        %v797 = vadd.f32 0.0, %v796
        %v798 = vpop.f32.mrb[0].mxu0
        %799 = vmatprep.mubr.f32.mxu0 0.0
        %800 = vmatmul.mubr.f32.gmra.mrb[0].mxu0 %v664
        %v801 = vpop.f32.mrb[0].mxu0
        %v802 = vadd.f32 0.0, %v801
        %v803 = vpop.f32.mrb[0].mxu0
        %804 = vmatprep.mubr.f32.mxu0 0.0
        %805 = vmatmul.mubr.f32.gmra.mrb[0].mxu0 %v667
        %v806 = vpop.f32.mrb[0].mxu0
        %v807 = vadd.f32 0.0, %v806
        %v808 = vpop.f32.mrb[0].mxu0
        %809 = vmatprep.mubr.f32.mxu0 0.0
        %810 = vmatmul.mubr.f32.gmra.mrb[0].mxu0 %v670
        %v811 = vpop.f32.mrb[0].mxu0
        %v812 = vadd.f32 0.0, %v811
        %v813 = vpop.f32.mrb[0].mxu0
        %814 = vmatprep.mubr.f32.mxu0 0.0
        %815 = vmatmul.mubr.f32.gmra.mrb[0].mxu0 %v673
        %v816 = vpop.f32.mrb[0].mxu0
        %v817 = vadd.f32 0.0, %v816
        %v818 = vpop.f32.mrb[0].mxu0
        %819 = vdwg.mxu0
        %vm820 = vcmask 130048
        %821 = vst.msk [vmem:[%s184] sm:$0xff] %vm820, %v742
        %822 = vst.msk [vmem:[%s184 + $0x8] sm:$0xff] %vm820, %v747
        %825 = vrot.lane.b32.xlu0 %v752, 16
        %v826 = vpop.permute.xlu0 %825
        %827 = vrot.lane.b32.xlu0 %v757, 16
        %v828 = vpop.permute.xlu0 %827
        %vm831 = vcmask 261248
        %832 = vst.msk [vmem:[%s184] sm:$0xff] %vm831, %v826
        %833 = vst.msk [vmem:[%s184 + $0x8] sm:$0xff] %vm831, %v828
        %836 = vrot.lane.b32.xlu0 %v762, 32
        %v837 = vpop.permute.xlu0 %836
        %838 = vrot.lane.b32.xlu0 %v767, 32
        %v839 = vpop.permute.xlu0 %838
        %vm842 = vcmask 392448
        %843 = vst.msk [vmem:[%s184] sm:$0xff] %vm842, %v837
        %844 = vst.msk [vmem:[%s184 + $0x8] sm:$0xff] %vm842, %v839
        %847 = vrot.lane.b32.xlu0 %v772, 48
        %v848 = vpop.permute.xlu0 %847
        %849 = vrot.lane.b32.xlu0 %v777, 48
        %v850 = vpop.permute.xlu0 %849
        %vm853 = vcmask 523648
        %854 = vst.msk [vmem:[%s184] sm:$0xff] %vm853, %v848
        %855 = vst.msk [vmem:[%s184 + $0x8] sm:$0xff] %vm853, %v850
        %858 = vrot.lane.b32.xlu0 %v782, 64
        %v859 = vpop.permute.xlu0 %858
        %860 = vrot.lane.b32.xlu0 %v787, 64
        %v861 = vpop.permute.xlu0 %860
        %vm864 = vcmask 654848
        %865 = vst.msk [vmem:[%s184] sm:$0xff] %vm864, %v859
        %866 = vst.msk [vmem:[%s184 + $0x8] sm:$0xff] %vm864, %v861
        %869 = vrot.lane.b32.xlu0 %v792, 80
        %v870 = vpop.permute.xlu0 %869
        %871 = vrot.lane.b32.xlu0 %v797, 80
        %v872 = vpop.permute.xlu0 %871
        %vm875 = vcmask 786048
        %876 = vst.msk [vmem:[%s184] sm:$0xff] %vm875, %v870
        %877 = vst.msk [vmem:[%s184 + $0x8] sm:$0xff] %vm875, %v872
        %880 = vrot.lane.b32.xlu0 %v802, 96
        %v881 = vpop.permute.xlu0 %880
        %882 = vrot.lane.b32.xlu0 %v807, 96
        %v883 = vpop.permute.xlu0 %882
        %vm886 = vcmask 917248
        %887 = vst.msk [vmem:[%s184] sm:$0xff] %vm886, %v881
        %888 = vst.msk [vmem:[%s184 + $0x8] sm:$0xff] %vm886, %v883
        %891 = vrot.lane.b32.xlu0 %v812, 112
        %v892 = vpop.permute.xlu0 %891
        %893 = vrot.lane.b32.xlu0 %v817, 112
        %v894 = vpop.permute.xlu0 %893
        %vm897 = vcmask 1048448
        %898 = vst.msk [vmem:[%s184] sm:$0xff] %vm897, %v892
        %899 = vst.msk [vmem:[%s184 + $0x8] sm:$0xff] %vm897, %v894
        %p900 = scmp.lt.s32.totalorder %s18, 1
        %s901 = scalar_select %p900, %s18, 1
        %s902 = smul.addr %s901, 2
        %s903 = smul.addr %s902, 8
        %s904 = scalar_lea.vmem %s2, %s903
        %s905 = sand.u32 %s104, 1
        %s906 = scalar_lea.sflag [#allocation3], %s905
        %s907 = sand.u32 %s104, 1
        %s908 = smul.addr %s907, 16
        %s909 = scalar_lea.vmem [#allocation2], %s908
        // Predicated region
        $region36: #{tpu_custom_call.1} parent=27 // pred_check
          %p910 = pneg %p88
        $region37: #{tpu_custom_call.1} parent=27 // pred_check_branch
          %912 = sbr.rel (%p910) target = $region39
        $region38: #{tpu_custom_call.1} parent=27 // pred_region
          _
        $region39: #{tpu_custom_call.1} parent=27 // pred_fallthru
          _
        // Predicated region
        $region40: #{tpu_custom_call.1} parent=27 // pred_check
          %p913 = pneg %p114
        $region41: #{tpu_custom_call.1} parent=27 // pred_check_branch
          %915 = sbr.rel (%p913) target = $region43
        $region42: #{tpu_custom_call.1} parent=27 // pred_region
          %s917 = ssub.s32 256, 256
          %918 = vsyncadd %s906, %s917
          %s919 = smul.addr %s18, 2
          %s920 = smul.addr %s919, 128
          %s921 = scalar_lea.hbm %s3, %s920
          %s922 = sshll.u32 %s909, 4
          %s923 = int_to_ptr.vmem [resolvable:$true] %s922
          %928 = dma.vmem_to_hbm [thread:$0]  %s923, 256, %s921, %s906, 128, 128, 8
        $region43: #{tpu_custom_call.1} parent=27 // pred_fallthru
          _
      $region28: #{tpu_custom_call.1} parent=5 // pred_fallthru
        _
      %p929 = scmp.le.s32.totalorder 2, %s13
      // Predicated region
      $region44: #{tpu_custom_call.1} parent=5 // pred_check
        %p930 = pneg %p929
      $region45: #{tpu_custom_call.1} parent=5 // pred_check_branch
        %932 = sbr.rel (%p930) target = $region47
      $region46: #{tpu_custom_call.1} parent=5 // pred_region
        %s933 = ssub.s32 %s13, 2
        // Predicated region
        $region48: #{tpu_custom_call.1} parent=46 // pred_check
          %p934 = pneg %p94
        $region49: #{tpu_custom_call.1} parent=46 // pred_check_branch
          %936 = sbr.rel (%p934) target = $region51
        $region50: #{tpu_custom_call.1} parent=46 // pred_region
          %p937 = scmp.lt.s32.totalorder %s19, 1
          %s938 = scalar_select %p937, %s19, 1
          %s939 = smul.addr %s938, 2
          %s940 = smul.addr %s939, 8
          %s941 = scalar_lea.vmem %s2, %s940
        $region51: #{tpu_custom_call.1} parent=46 // pred_fallthru
          _
        // Predicated region
        $region52: #{tpu_custom_call.1} parent=46 // pred_check
          %p942 = pneg %p120
        $region53: #{tpu_custom_call.1} parent=46 // pred_check_branch
          %944 = sbr.rel (%p942) target = $region55
        $region54: #{tpu_custom_call.1} parent=46 // pred_region
          %s945 = sand.u32 %s105, 1
          %s946 = scalar_lea.sflag [#allocation3], %s945
          %s947 = sand.u32 %s105, 1
          %s948 = smul.addr %s947, 16
          %s949 = scalar_lea.vmem [#allocation2], %s948
          %950 = dma.done %s946, 256
        $region55: #{tpu_custom_call.1} parent=46 // pred_fallthru
          _
      $region47: #{tpu_custom_call.1} parent=5 // pred_fallthru
        _
    $region6: #{tpu_custom_call.1} parent=1 // loop_footer
      %s17 = sadd.s32 1, %s13
    $region7: #{tpu_custom_call.1} parent=1 // loop_footer_branch
      %12 = sbr.rel target = $region3
    $region8: #{tpu_custom_call.1} parent=1 // loop_exit
      _
    %951 = vsyncpa [#allocation3], 1
    %s952 = scalar_lea.sflag [#allocation3], 1
    %953 = vsyncpa %s952, 1

</llo_original>
